<compile_context>
chip_gen: v7x
topology: tpu7x:2x2x1
jax: 0.10.0
libtpu: 0.0.40
codegen_flags: <defaults>
</compile_context>

<pallas_src>
import jax
import jax.numpy as jnp
from jax.experimental import pallas as pl
from jax.experimental.pallas import tpu as pltpu


def _row_mean_kernel(x_ref, o_ref):
    # x_ref: (TILE_R, K) block of flattened rows; o_ref: (1, TILE_R) of means.
    k = x_ref.shape[-1]
    x = x_ref[...].astype(jnp.float32)          # f32 accumulation (fast path on all gens)
    s = jnp.sum(x, axis=-1)                     # (TILE_R,) — XLU cross-lane reduce
    o_ref[...] = (s * (1.0 / float(k))).reshape(1, -1).astype(o_ref.dtype)


def _round_up(a: int, b: int) -> int:
    return (a + b - 1) // b * b


def _choose_tile_rows(num_rows: int, k: int) -> int:
    """Pick a row-tile that keeps 2x (double buffer) input tiles + the f32 temp
    comfortably under the smallest default scoped-VMEM across generations
    (v5e: 16 MiB scoped; v7x: 32 MiB scoped of 64 MiB physical)."""
    per_buffer_bytes = 4 * 1024 * 1024          # f32-equivalent bytes per input buffer
    rows = per_buffer_bytes // (k * 4)
    rows = max(8, (rows // 8) * 8)              # multiple of 8 sublanes
    rows = min(rows, 1024)                      # big enough to amortize grid-step overhead
    rows = min(rows, _round_up(num_rows, 8))    # never larger than the (padded) array
    return rows


def mean_hw(x: jax.Array) -> jax.Array:
    """Equivalent of torch.mean(x, dim=(2, 3)) for an NCHW tensor."""
    n, c, h, w = x.shape
    r, k = n * c, h * w

    # Flatten to (rows, H*W): lane-dense loads + clean axis=-1 reduction.
    xf = x.reshape(r, k)

    tile_r = _choose_tile_rows(r, k)
    r_pad = _round_up(r, tile_r)
    if r_pad != r:
        # Zero-padded rows reduce to 0 and are sliced away after the call.
        xf = jnp.pad(xf, ((0, r_pad - r), (0, 0)))
    num_tiles = r_pad // tile_r

    # Note: for extreme H*W (k*4B*8 rows > ~4 MiB) a second "arbitrary" grid
    # axis over K-chunks with a VMEM accumulator would be needed; typical
    # activation spatial sizes fit a full row per block, so we keep one axis.
    out = pl.pallas_call(
        _row_mean_kernel,
        out_shape=jax.ShapeDtypeStruct((num_tiles, tile_r), x.dtype),
        grid=(num_tiles,),
        in_specs=[pl.BlockSpec((tile_r, k), lambda i: (i, 0))],
        out_specs=pl.BlockSpec((1, tile_r), lambda i: (i, 0)),
        compiler_params=pltpu.CompilerParams(
            dimension_semantics=("parallel",),
        ),
    )(xf)

    return out.reshape(r_pad)[:r].reshape(n, c)


if __name__ == "__main__":
    key = jax.random.PRNGKey(0)
    # Small NCHW input consistent with the module's conv-style usage.
    x = jax.random.normal(key, (2, 4, 16, 16), dtype=jnp.float32)

    out = mean_hw(x)
    jax.block_until_ready(out)

    # Reference check against plain JAX (same semantics as torch.mean(x, (2, 3))).
    ref = jnp.mean(x, axis=(2, 3))
    assert out.shape == (2, 4), out.shape
    assert jnp.allclose(out, ref, atol=1e-5, rtol=1e-5), "mismatch vs reference"

    print("KERNEL_OK")
</pallas_src>

<mosaic_0001>
module attributes {stable_mosaic.version = 11 : i64} {
  func.func @_row_mean_kernel(%arg0: i32, %arg1: memref<8x256xf32, #tpu.memory_space<vmem>>, %arg2: memref<1x8xf32, #tpu.memory_space<vmem>>) attributes {dimension_semantics = [#tpu.dimension_semantics<parallel>], iteration_bounds = array<i64: 1>, scalar_prefetch = 0 : i64, scratch_operands = 0 : i64, tpu.core_type = #tpu.core_type<tc>, window_params = [{transform_indices = @transform_0, window_bounds = array<i64: 8, 256>}, {transform_indices = @transform_1, window_bounds = array<i64: 1, 8>}]} {
    %c0 = arith.constant 0 : index
    %c0_0 = arith.constant 0 : index
    %0 = vector.load %arg1[%c0, %c0_0] : memref<8x256xf32, #tpu.memory_space<vmem>>, vector<8x256xf32>
    %cst = arith.constant dense<0.000000e+00> : vector<8xf32>
    %1 = vector.multi_reduction <add>, %0, %cst [1] : vector<8x256xf32> to vector<8xf32>
    %cst_1 = arith.constant 3.906250e-03 : f32
    %2 = vector.broadcast %cst_1 : f32 to vector<8xf32>
    %3 = arith.mulf %1, %2 : vector<8xf32>
    %4 = vector.shape_cast %3 : vector<8xf32> to vector<1x8xf32>
    %c0_2 = arith.constant 0 : index
    %c0_3 = arith.constant 0 : index
    %5 = vector.load %arg2[%c0_2, %c0_3] : memref<1x8xf32, #tpu.memory_space<vmem>>, vector<1x8xf32>
    tpu.vector_store %arg2[%c0_2, %c0_3], %4 {strides = array<i32>} : memref<1x8xf32, #tpu.memory_space<vmem>>, vector<1x8xf32>,
    return
  }
  func.func @transform_0(%arg0: i32) -> (i32, i32) {
    %c0_i32 = arith.constant 0 : i32
    %c0_i32_0 = arith.constant 0 : i32
    return %arg0, %c0_i32 : i32, i32
  }
  func.func @transform_1(%arg0: i32) -> (i32, i32) {
    %c0_i32 = arith.constant 0 : i32
    %c0_i32_0 = arith.constant 0 : i32
    return %arg0, %c0_i32 : i32, i32
  }
}

</mosaic_0001>

<llo_original>
// kernel: tpu_custom_call.1
$region0: #{tpu_custom_call.1}
  #allocation0 [shape = 'u32[]', space=smem, size = 0x4, offset = 0x4, fixed_abs, tag = 'smem constant byte address 0x4 - core index']
  #allocation1 [shape = 'u32[144,128]{1,0:T(1,128)}', space=vmem, size = 0x12000, scoped, tag = 'internal scratch']
  %s0 = inlined_call_operand.hbm [shape: f32[8,256], index: 0, kind: input, shape index: {}]
  %s1 = inlined_call_operand.hbm [shape: f32[1,8], index: 1, kind: output, shape index: {}]
  %s2 = sld [smem:[#allocation0]]
  $region18: #{tpu_custom_call.1} parent=0
    _
  %s4 = ssub.s32 1, %s2
  %s5 = scalar_select 0, %s4, %s2
  $region1: #{tpu_custom_call.1} parent=0
    #allocation2 [shape = 'u8[8192]{0}', space=vmem, size = 0x2000, scoped, tag = 'input window, operand 0, single buffered']
    #allocation3 [shape = 's32[1]{0}', space=sflag, size = 0x4, scoped, tag = 'scoped memory for tpu_custom_call.1']
    #allocation4 [shape = 's32[1]{0}', space=sflag, size = 0x4, scoped, tag = 'scoped memory for tpu_custom_call.1']
    #allocation5 [shape = 'u8[512]{0}', space=vmem, size = 0x400, scoped, tag = 'output window, operand 0, single buffered']
    %6 = vsyncpa [#allocation3], 0
    %7 = vsyncpa [#allocation4], 0
    // Predicated region
    $region2: #{tpu_custom_call.1} parent=1 // pred_check
      _
    $region3: #{tpu_custom_call.1} parent=1 // pred_check_branch
      %9 = sbr.rel (0) target = $region5
    $region4: #{tpu_custom_call.1} parent=1 // pred_region
      %s11 = ssub.s32 256, 256
      %12 = vsyncadd [#allocation3], %s11
      %s14 = sshll.u32 [#allocation2], 4
      %s15 = int_to_ptr.vmem [resolvable:$true] %s14
      %17 = dma.hbm_to_vmem [thread:$0]  %s0, 256, %s15, [#allocation3]
    $region5: #{tpu_custom_call.1} parent=1 // pred_fallthru
      _
    // Predicated region
    $region6: #{tpu_custom_call.1} parent=1 // pred_check
      _
    $region7: #{tpu_custom_call.1} parent=1 // pred_check_branch
      %19 = sbr.rel (0) target = $region9
    $region8: #{tpu_custom_call.1} parent=1 // pred_region
      %20 = dma.done [#allocation3], 256
    $region9: #{tpu_custom_call.1} parent=1 // pred_fallthru
      _
    %v21 = vld [vmem:[#allocation2] sm:$0xff]
    %v22 = vld [vmem:[#allocation2 + $0x8] sm:$0xff]
    %v23 = vadd.f32 %v21, %v22
    %24 = vadd.xlane.f32.xlu0 %v23
    %v25 = vpop.xlane.xlu0 %24
    %v26 = vmul.f32 %v25, 0.00390625
    %v28 = vlaneseq
    %v29 = vand.u32 %v28, 127
    %v30 = vlaneseq
    %v31 = vshrl.u32 %v30, 7
    %v32 = vsub.s32 %v29, %v31
    %v33 = vrot.slane %v26, %v32
    %vm35 = vcmask 57344
    %36 = vst.msk [vmem:[#allocation5] sm:$0x1] %vm35, %v33
    // Predicated region
    $region10: #{tpu_custom_call.1} parent=1 // pred_check
      _
    $region11: #{tpu_custom_call.1} parent=1 // pred_check_branch
      %38 = sbr.rel (0) target = $region13
    $region12: #{tpu_custom_call.1} parent=1 // pred_region
      %s40 = ssub.s32 16, 16
      %41 = vsyncadd [#allocation4], %s40
      %s43 = sshll.u32 [#allocation5], 4
      %s44 = int_to_ptr.vmem [resolvable:$true] %s43
      %46 = dma.vmem_to_hbm [thread:$0]  %s44, 16, %s1, [#allocation4]
    $region13: #{tpu_custom_call.1} parent=1 // pred_fallthru
      _
    // Predicated region
    $region14: #{tpu_custom_call.1} parent=1 // pred_check
      _
    $region15: #{tpu_custom_call.1} parent=1 // pred_check_branch
      %48 = sbr.rel (0) target = $region17
    $region16: #{tpu_custom_call.1} parent=1 // pred_region
      %49 = dma.done [#allocation4], 16
    $region17: #{tpu_custom_call.1} parent=1 // pred_fallthru
      _
    %50 = vsyncpa [#allocation3], 1
    %51 = vsyncpa [#allocation4], 1

</llo_original>
